<compile_context>
chip_gen: v6e
topology: v6e:2x2x1
jax: 0.10.0
libtpu: 0.0.40
codegen_flags: <defaults>
</compile_context>

<pallas_src>
import functools

import jax
import jax.numpy as jnp
from jax.experimental import pallas as pl
from jax.experimental.pallas import tpu as pltpu


def _round_up(x, m):
    return -(-x // m) * m


def _focal_loss_kernel(preds_ref, labels_ref, out_ref, acc_ref, *,
                       alpha, gamma, num_classes, n_steps, ts, n_rows, padded):
    """One grid step over a dense (TS, 128) slab of rows, classes unrolled.

    preds_ref : [C, TS, 128]  (input dtype; cast to f32 here)
    labels_ref: [TS, 128]     int32
    out_ref   : [1, 1]        f32 partial sum (written only at the last step)
    acc_ref   : [TS, 128]     f32 vector accumulator (VMEM scratch)
    """
    C = num_classes
    step = pl.program_id(1)
    gblk = pl.program_id(0) * n_steps + step          # global 128-row-slab block

    @pl.when(step == 0)
    def _init():
        acc_ref[...] = jnp.zeros_like(acc_ref)

    labels = labels_ref[...]                          # [TS, 128] int32
    xs = [preds_ref[k].astype(jnp.float32) for k in range(C)]   # C x [TS, 128]

    # Row-wise max over the unrolled class axis (pure VPU, no XLU reduce).
    m = xs[0]
    for x in xs[1:]:
        m = jnp.maximum(m, x)
    shifted = [x - m for x in xs]
    es = [jnp.exp(s) for s in shifted]
    denom = es[0]
    for e in es[1:]:
        denom = denom + e

    # "Gather" the label class via nested selects (no one-hot temporaries).
    sy = shifted[C - 1]
    ay = jnp.full(labels.shape, alpha[C - 1], dtype=jnp.float32)
    for k in range(C - 2, -1, -1):
        is_k = labels == k
        sy = jnp.where(is_k, shifted[k], sy)
        ay = jnp.where(is_k, jnp.float32(alpha[k]), ay)

    logp_y = sy - jnp.log(denom)                      # log-softmax of label class
    p_y = jnp.exp(logp_y)                             # softmax of label class
    w = jnp.maximum(1.0 - p_y, 0.0)                   # clamp: avoids pow(neg, frac) NaN

    # Integer gamma -> repeated VPU multiplies; general gamma -> power.
    if float(gamma) == int(gamma) and int(gamma) >= 0:
        g = int(gamma)
        if g == 0:
            focal = jnp.ones_like(w)
        else:
            focal = w
            for _ in range(g - 1):
                focal = focal * w
    else:
        focal = jnp.power(w, jnp.float32(gamma))

    loss = -(ay * focal * logp_y)                     # [TS, 128]

    if not padded:
        # No padded rows anywhere: skip the mask entirely.
        acc_ref[...] += loss
    else:
        block_rows = ts * 128
        first_masked = n_rows // block_rows           # static Python int

        @pl.when(gblk < first_masked)
        def _acc_full():                              # fully-valid tile: no mask ops
            acc_ref[...] += loss

        @pl.when(gblk >= first_masked)
        def _acc_masked():                            # tile contains padded rows
            s_iota = jax.lax.broadcasted_iota(jnp.int32, (ts, 128), 0)
            l_iota = jax.lax.broadcasted_iota(jnp.int32, (ts, 128), 1)
            row = (gblk * ts + s_iota) * 128 + l_iota
            acc_ref[...] += jnp.where(row < n_rows, loss, 0.0)

    @pl.when(step == n_steps - 1)
    def _finalize():
        # Single cross-sublane + cross-lane reduce per partial.
        out_ref[...] = jnp.sum(jnp.sum(acc_ref[...], axis=0, keepdims=True),
                               axis=1, keepdims=True)


def focal_loss_pallas(preds, labels, *, alpha=0.25, gamma=2, num_classes=3,
                      size_average=True, tile_rows=256 * 1024, num_partials=1):
    """Replicates focal_loss.forward(preds, labels). Returns a scalar float32.

    preds:  [B, N, C] or [B, C] float (any float dtype; cast to f32 in-kernel)
    labels: [B, N]    or [B]    int
    num_partials: 1 on single-TensorCore chips (v5e/v6e); use 2 on v7x.
    """
    # Build the alpha vector exactly like the module's __init__ (Python consts,
    # baked into the kernel -> no alpha input at all).
    if isinstance(alpha, (list, tuple)):
        assert len(alpha) == num_classes
        alpha_list = tuple(float(a) for a in alpha)
    else:
        assert alpha < 1
        alpha_list = (float(alpha),) + (float(1.0 - alpha),) * (num_classes - 1)

    C = preds.shape[-1]
    assert C == num_classes

    preds2d = preds.reshape(-1, C)                    # [M, C], original dtype
    M = preds2d.shape[0]
    labels1d = labels.reshape(-1).astype(jnp.int32)   # no-op if already int32

    P = int(num_partials)

    # --- tile sizing: rows grouped into 128-row slabs (lane axis) ------------
    itemsize = preds2d.dtype.itemsize
    sub = {4: 8, 2: 16, 1: 32}.get(itemsize, 8)       # sublane tiling unit
    n_blocks = -(-M // 128)                           # number of 128-row slabs

    ts = max(sub, (int(tile_rows) // 128) // sub * sub)
    # Don't allocate a tile bigger than one partial's worth of work.
    ts = min(ts, _round_up(-(-n_blocks // P), sub))
    ts = max(ts, sub)
    # Cap double-buffered inputs + f32 accumulator at ~40 MiB (v7x VMEM = 64 MiB).
    vmem_tile_budget = 40 * 1024 * 1024
    per_unit = 128 * (C * itemsize + labels1d.dtype.itemsize)   # per 128-row slab
    acc_unit = 128 * 4
    ts_cap = max(sub, (vmem_tile_budget // (2 * per_unit + acc_unit)) // sub * sub)
    ts = min(ts, ts_cap)

    n_steps = -(-n_blocks // (P * ts))
    M_pad = P * n_steps * ts * 128

    # --- layout: class-major, lane-dense slabs [C, M_pad//128, 128] ----------
    # TODO(synk): this transpose (and the pad when M_pad > M) is one extra HBM
    # pass over preds; it disappears entirely if the producer emits class-major
    # ([C, M]) predictions.
    preds_cm = preds2d.T                              # [C, M]
    if M_pad != M:
        preds_cm = jnp.pad(preds_cm, ((0, 0), (0, M_pad - M)))
        labels1d = jnp.pad(labels1d, (0, M_pad - M))
    preds_slab = preds_cm.reshape(C, M_pad // 128, 128)
    labels_slab = labels1d.reshape(M_pad // 128, 128)

    kernel = functools.partial(
        _focal_loss_kernel, alpha=alpha_list, gamma=gamma, num_classes=C,
        n_steps=n_steps, ts=ts, n_rows=M, padded=(M_pad != M))

    partials = pl.pallas_call(
        kernel,
        out_shape=jax.ShapeDtypeStruct((P, 1, 1), jnp.float32),
        grid_spec=pltpu.PrefetchScalarGridSpec(
            num_scalar_prefetch=0,
            grid=(P, n_steps),
            in_specs=[
                pl.BlockSpec((C, ts, 128), lambda p, i: (0, p * n_steps + i, 0)),
                pl.BlockSpec((ts, 128), lambda p, i: (p * n_steps + i, 0)),
            ],
            out_specs=pl.BlockSpec((None, 1, 1), lambda p, i: (p, 0, 0)),
            scratch_shapes=[pltpu.VMEM((ts, 128), jnp.float32)],
        ),
        compiler_params=pltpu.CompilerParams(
            dimension_semantics=("parallel", "arbitrary"),
            vmem_limit_bytes=48 * 1024 * 1024,
        ),
    )(preds_slab, labels_slab)

    total = jnp.sum(partials)
    if size_average:
        total = total / jnp.float32(M)
    return total


def focal_loss_ref(preds, labels, *, alpha=0.25, gamma=2, num_classes=3,
                   size_average=True):
    """Pure-JAX reference mirroring the PyTorch forward."""
    if isinstance(alpha, (list, tuple)):
        alpha_vec = jnp.asarray(alpha, dtype=jnp.float32)
    else:
        alpha_vec = jnp.concatenate([
            jnp.full((1,), alpha, dtype=jnp.float32),
            jnp.full((num_classes - 1,), 1.0 - alpha, dtype=jnp.float32),
        ])
    x = preds.reshape(-1, preds.shape[-1]).astype(jnp.float32)
    lab = labels.reshape(-1).astype(jnp.int32)
    soft = jax.nn.softmax(x, axis=1)
    logsoft = jnp.log(soft)
    p = jnp.take_along_axis(soft, lab[:, None], axis=1)[:, 0]
    logp = jnp.take_along_axis(logsoft, lab[:, None], axis=1)[:, 0]
    a = alpha_vec[lab]
    loss = -a * jnp.power(1.0 - p, gamma) * logp
    return jnp.mean(loss) if size_average else jnp.sum(loss)


if __name__ == "__main__":
    key = jax.random.PRNGKey(0)
    k1, k2, k3, k4, k5, k6 = jax.random.split(key, 6)
    C = 3

    # Detection-style [B, N, C] input (small), mean reduction.
    B, N = 2, 16
    preds = jax.random.normal(k1, (B, N, C), dtype=jnp.float32)
    labels = jax.random.randint(k2, (B, N), 0, C, dtype=jnp.int32)
    out = jax.block_until_ready(
        focal_loss_pallas(preds, labels, alpha=0.25, gamma=2, num_classes=C,
                          size_average=True))
    ref = focal_loss_ref(preds, labels, alpha=0.25, gamma=2, num_classes=C,
                         size_average=True)
    assert jnp.allclose(out, ref, rtol=1e-5, atol=1e-6), (out, ref)

    # Classification-style [B, C] input, row count not a multiple of 128,
    # sum reduction -> exercises the masked-tail accumulation path.
    B2 = 300
    preds2 = jax.random.normal(k3, (B2, C), dtype=jnp.float32)
    labels2 = jax.random.randint(k4, (B2,), 0, C, dtype=jnp.int32)
    out2 = jax.block_until_ready(
        focal_loss_pallas(preds2, labels2, alpha=0.25, gamma=2, num_classes=C,
                          size_average=False))
    ref2 = focal_loss_ref(preds2, labels2, alpha=0.25, gamma=2, num_classes=C,
                          size_average=False)
    assert jnp.allclose(out2, ref2, rtol=1e-5, atol=1e-5), (out2, ref2)

    # List alpha + non-integer gamma + 2 partials: exercises the per-class
    # alpha selects, the clamped general-power path and the multi-partial grid.
    B3, N3 = 3, 500
    preds3 = jax.random.normal(k5, (B3, N3, C), dtype=jnp.float32)
    labels3 = jax.random.randint(k6, (B3, N3), 0, C, dtype=jnp.int32)
    out3 = jax.block_until_ready(
        focal_loss_pallas(preds3, labels3, alpha=[0.2, 0.3, 0.5], gamma=1.5,
                          num_classes=C, size_average=True, num_partials=2))
    ref3 = focal_loss_ref(preds3, labels3, alpha=[0.2, 0.3, 0.5], gamma=1.5,
                          num_classes=C, size_average=True)
    assert jnp.allclose(out3, ref3, rtol=1e-5, atol=1e-6), (out3, ref3)

    print("KERNEL_OK")
</pallas_src>

<mosaic_0001>
module attributes {stable_mosaic.version = 11 : i64} {
  func.func @_focal_loss_kernel(%arg0: i32, %arg1: i32, %arg2: memref<3x8x128xf32, #tpu.memory_space<vmem>>, %arg3: memref<8x128xi32, #tpu.memory_space<vmem>>, %arg4: memref<1x1x1xf32, #tpu.memory_space<vmem>>, %arg5: memref<8x128xf32, #tpu.memory_space<vmem>>) attributes {dimension_semantics = [#tpu.dimension_semantics<parallel>, #tpu.dimension_semantics<arbitrary>], iteration_bounds = array<i64: 1, 1>, scalar_prefetch = 0 : i64, scratch_operands = 1 : i64, tpu.core_type = #tpu.core_type<tc>, window_params = [{transform_indices = @transform_0, window_bounds = array<i64: 3, 8, 128>}, {transform_indices = @transform_1, window_bounds = array<i64: 8, 128>}, {transform_indices = @transform_2, window_bounds = array<i64: 1, 1, 1>}]} {
    %c1_i32 = arith.constant 1 : i32
    %0 = arith.muli %arg0, %c1_i32 : i32
    %1 = arith.addi %0, %arg1 : i32
    %c0_i32 = arith.constant 0 : i32
    %2 = arith.cmpi eq, %arg1, %c0_i32 : i32
    %3 = arith.extui %2 : i1 to i32
    %c0_i32_0 = arith.constant 0 : i32
    %4 = arith.cmpi ne, %3, %c0_i32_0 : i32
    scf.if %4 {
      %cst_22 = arith.constant 0.000000e+00 : f32
      %54 = vector.broadcast %cst_22 : f32 to vector<8x128xf32>
      %c0_23 = arith.constant 0 : index
      %c0_24 = arith.constant 0 : index
      %55 = vector.load %arg5[%c0_23, %c0_24] : memref<8x128xf32, #tpu.memory_space<vmem>>, vector<8x128xf32>
      tpu.vector_store %arg5[%c0_23, %c0_24], %54 {strides = array<i32>} : memref<8x128xf32, #tpu.memory_space<vmem>>, vector<8x128xf32>,
    } else {
    }
    %c0 = arith.constant 0 : index
    %c0_1 = arith.constant 0 : index
    %5 = vector.load %arg3[%c0, %c0_1] : memref<8x128xi32, #tpu.memory_space<vmem>>, vector<8x128xi32>
    %c0_2 = arith.constant 0 : index
    %c0_3 = arith.constant 0 : index
    %c0_4 = arith.constant 0 : index
    %6 = vector.load %arg2[%c0_2, %c0_3, %c0_4] : memref<3x8x128xf32, #tpu.memory_space<vmem>>, vector<1x8x128xf32>
    %7 = vector.shape_cast %6 : vector<1x8x128xf32> to vector<8x128xf32>
    %c1 = arith.constant 1 : index
    %c0_5 = arith.constant 0 : index
    %c0_6 = arith.constant 0 : index
    %8 = vector.load %arg2[%c1, %c0_5, %c0_6] : memref<3x8x128xf32, #tpu.memory_space<vmem>>, vector<1x8x128xf32>
    %9 = vector.shape_cast %8 : vector<1x8x128xf32> to vector<8x128xf32>
    %c2 = arith.constant 2 : index
    %c0_7 = arith.constant 0 : index
    %c0_8 = arith.constant 0 : index
    %10 = vector.load %arg2[%c2, %c0_7, %c0_8] : memref<3x8x128xf32, #tpu.memory_space<vmem>>, vector<1x8x128xf32>
    %11 = vector.shape_cast %10 : vector<1x8x128xf32> to vector<8x128xf32>
    %12 = arith.maximumf %7, %9 : vector<8x128xf32>
    %13 = arith.maximumf %12, %11 : vector<8x128xf32>
    %14 = arith.subf %7, %13 : vector<8x128xf32>
    %15 = arith.subf %9, %13 : vector<8x128xf32>
    %16 = arith.subf %11, %13 : vector<8x128xf32>
    %17 = math.exp %14 : vector<8x128xf32>
    %18 = math.exp %15 : vector<8x128xf32>
    %19 = math.exp %16 : vector<8x128xf32>
    %20 = arith.addf %17, %18 : vector<8x128xf32>
    %21 = arith.addf %20, %19 : vector<8x128xf32>
    %cst = arith.constant 7.500000e-01 : f32
    %22 = vector.broadcast %cst : f32 to vector<8x128xf32>
    %c1_i32_9 = arith.constant 1 : i32
    %23 = vector.broadcast %c1_i32_9 : i32 to vector<8x128xi32>
    %24 = arith.cmpi eq, %5, %23 : vector<8x128xi32>
    %25 = arith.select %24, %15, %16 : vector<8x128xi1>, vector<8x128xf32>
    %cst_10 = arith.constant 7.500000e-01 : f32
    %26 = vector.broadcast %cst_10 : f32 to vector<8x128xf32>
    %27 = arith.select %24, %26, %22 : vector<8x128xi1>, vector<8x128xf32>
    %c0_i32_11 = arith.constant 0 : i32
    %28 = vector.broadcast %c0_i32_11 : i32 to vector<8x128xi32>
    %29 = arith.cmpi eq, %5, %28 : vector<8x128xi32>
    %30 = arith.select %29, %14, %25 : vector<8x128xi1>, vector<8x128xf32>
    %cst_12 = arith.constant 2.500000e-01 : f32
    %31 = vector.broadcast %cst_12 : f32 to vector<8x128xf32>
    %32 = arith.select %29, %31, %27 : vector<8x128xi1>, vector<8x128xf32>
    %33 = math.log %21 : vector<8x128xf32>
    %34 = arith.subf %30, %33 : vector<8x128xf32>
    %35 = math.exp %34 : vector<8x128xf32>
    %cst_13 = arith.constant 1.000000e+00 : f32
    %36 = vector.broadcast %cst_13 : f32 to vector<8x128xf32>
    %37 = arith.subf %36, %35 : vector<8x128xf32>
    %cst_14 = arith.constant 0.000000e+00 : f32
    %38 = vector.broadcast %cst_14 : f32 to vector<8x128xf32>
    %39 = arith.maximumf %37, %38 : vector<8x128xf32>
    %40 = arith.mulf %39, %39 : vector<8x128xf32>
    %41 = arith.mulf %32, %40 : vector<8x128xf32>
    %42 = arith.mulf %41, %34 : vector<8x128xf32>
    %cst_15 = arith.constant 0.000000e+00 : f32
    %43 = vector.broadcast %cst_15 : f32 to vector<8x128xf32>
    %44 = arith.subf %43, %42 : vector<8x128xf32>
    %c0_i32_16 = arith.constant 0 : i32
    %45 = arith.cmpi slt, %1, %c0_i32_16 : i32
    %46 = arith.extui %45 : i1 to i32
    %c0_i32_17 = arith.constant 0 : i32
    %47 = arith.cmpi ne, %46, %c0_i32_17 : i32
    scf.if %47 {
      %c0_22 = arith.constant 0 : index
      %c0_23 = arith.constant 0 : index
      %54 = vector.load %arg5[%c0_22, %c0_23] : memref<8x128xf32, #tpu.memory_space<vmem>>, vector<8x128xf32>
      %55 = arith.addf %54, %44 : vector<8x128xf32>
      %c0_24 = arith.constant 0 : index
      %c0_25 = arith.constant 0 : index
      %56 = vector.load %arg5[%c0_24, %c0_25] : memref<8x128xf32, #tpu.memory_space<vmem>>, vector<8x128xf32>
      tpu.vector_store %arg5[%c0_24, %c0_25], %55 {strides = array<i32>} : memref<8x128xf32, #tpu.memory_space<vmem>>, vector<8x128xf32>,
    } else {
    }
    %c0_i32_18 = arith.constant 0 : i32
    %48 = arith.cmpi sge, %1, %c0_i32_18 : i32
    %49 = arith.extui %48 : i1 to i32
    %c0_i32_19 = arith.constant 0 : i32
    %50 = arith.cmpi ne, %49, %c0_i32_19 : i32
    scf.if %50 {
      %54 = tpu.iota {dimensions = array<i32: 0>} : vector<8x128xi32>
      %55 = tpu.iota {dimensions = array<i32: 1>} : vector<8x128xi32>
      %c8_i32 = arith.constant 8 : i32
      %56 = arith.muli %1, %c8_i32 : i32
      %57 = vector.broadcast %56 : i32 to vector<8x128xi32>
      %58 = arith.addi %57, %54 : vector<8x128xi32>
      %c128_i32 = arith.constant 128 : i32
      %59 = vector.broadcast %c128_i32 : i32 to vector<8x128xi32>
      %60 = arith.muli %58, %59 : vector<8x128xi32>
      %61 = arith.addi %60, %55 : vector<8x128xi32>
      %c0_22 = arith.constant 0 : index
      %c0_23 = arith.constant 0 : index
      %62 = vector.load %arg5[%c0_22, %c0_23] : memref<8x128xf32, #tpu.memory_space<vmem>>, vector<8x128xf32>
      %c32_i32 = arith.constant 32 : i32
      %63 = vector.broadcast %c32_i32 : i32 to vector<8x128xi32>
      %64 = arith.cmpi slt, %61, %63 : vector<8x128xi32>
      %cst_24 = arith.constant 0.000000e+00 : f32
      %65 = vector.broadcast %cst_24 : f32 to vector<8x128xf32>
      %66 = arith.select %64, %44, %65 : vector<8x128xi1>, vector<8x128xf32>
      %67 = arith.addf %62, %66 : vector<8x128xf32>
      %c0_25 = arith.constant 0 : index
      %c0_26 = arith.constant 0 : index
      %68 = vector.load %arg5[%c0_25, %c0_26] : memref<8x128xf32, #tpu.memory_space<vmem>>, vector<8x128xf32>
      tpu.vector_store %arg5[%c0_25, %c0_26], %67 {strides = array<i32>} : memref<8x128xf32, #tpu.memory_space<vmem>>, vector<8x128xf32>,
    } else {
    }
    %c0_i32_20 = arith.constant 0 : i32
    %51 = arith.cmpi eq, %arg1, %c0_i32_20 : i32
    %52 = arith.extui %51 : i1 to i32
    %c0_i32_21 = arith.constant 0 : i32
    %53 = arith.cmpi ne, %52, %c0_i32_21 : i32
    scf.if %53 {
      %c0_22 = arith.constant 0 : index
      %c0_23 = arith.constant 0 : index
      %54 = vector.load %arg5[%c0_22, %c0_23] : memref<8x128xf32, #tpu.memory_space<vmem>>, vector<8x128xf32>
      %cst_24 = arith.constant dense<0.000000e+00> : vector<128xf32>
      %55 = vector.multi_reduction <add>, %54, %cst_24 [0] : vector<8x128xf32> to vector<128xf32>
      %56 = vector.shape_cast %55 : vector<128xf32> to vector<1x128xf32>
      %cst_25 = arith.constant dense<0.000000e+00> : vector<1xf32>
      %57 = vector.multi_reduction <add>, %56, %cst_25 [1] : vector<1x128xf32> to vector<1xf32>
      %58 = vector.shape_cast %57 : vector<1xf32> to vector<1x1xf32>
      %c0_26 = arith.constant 0 : index
      %c0_27 = arith.constant 0 : index
      %c0_28 = arith.constant 0 : index
      %59 = vector.load %arg4[%c0_26, %c0_27, %c0_28] : memref<1x1x1xf32, #tpu.memory_space<vmem>>, vector<1x1x1xf32>
      %60 = vector.shape_cast %59 : vector<1x1x1xf32> to vector<1x1xf32>
      %61 = vector.shape_cast %58 : vector<1x1xf32> to vector<1x1x1xf32>
      tpu.vector_store %arg4[%c0_26, %c0_27, %c0_28], %61 {strides = array<i32>} : memref<1x1x1xf32, #tpu.memory_space<vmem>>, vector<1x1x1xf32>,
    } else {
    }
    return
  }
  func.func @transform_0(%arg0: i32, %arg1: i32) -> (i32, i32, i32) {
    %c1_i32 = arith.constant 1 : i32
    %0 = arith.muli %arg0, %c1_i32 : i32
    %1 = arith.addi %0, %arg1 : i32
    %c0_i32 = arith.constant 0 : i32
    %c0_i32_0 = arith.constant 0 : i32
    %c0_i32_1 = arith.constant 0 : i32
    return %c0_i32, %1, %c0_i32_0 : i32, i32, i32
  }
  func.func @transform_1(%arg0: i32, %arg1: i32) -> (i32, i32) {
    %c1_i32 = arith.constant 1 : i32
    %0 = arith.muli %arg0, %c1_i32 : i32
    %1 = arith.addi %0, %arg1 : i32
    %c0_i32 = arith.constant 0 : i32
    %c0_i32_0 = arith.constant 0 : i32
    return %1, %c0_i32 : i32, i32
  }
  func.func @transform_2(%arg0: i32, %arg1: i32) -> (i32, i32, i32) {
    %c0_i32 = arith.constant 0 : i32
    %c0_i32_0 = arith.constant 0 : i32
    %c0_i32_1 = arith.constant 0 : i32
    return %arg0, %c0_i32, %c0_i32_0 : i32, i32, i32
  }
}

</mosaic_0001>

<llo_original>
// kernel: tpu_custom_call.1
$region0: #{tpu_custom_call.1}
  #allocation0 [shape = 'u32[]', space=smem, size = 0x4, offset = 0x4, fixed_abs, tag = 'smem constant byte address 0x4 - core index']
  #allocation1 [shape = 'u32[144,128]{1,0:T(1,128)}', space=vmem, size = 0x12000, scoped, tag = 'internal scratch']
  #allocation2 [shape = 'f32[8,128]{1,0:T(8,128)}', space=vmem, size = 0x1000, scoped, tag = 'scratch operand']
  %s0 = inlined_call_operand.hbm [shape: f32[3,8,128], index: 0, kind: input, shape index: {}]
  %s1 = inlined_call_operand.hbm [shape: s32[8,128], index: 1, kind: input, shape index: {}]
  %s2 = inlined_call_operand.hbm [shape: f32[1,1,1], index: 2, kind: output, shape index: {}]
  %s3 = sld [smem:[#allocation0]]
  $region42: #{tpu_custom_call.1} parent=0
    _
  %s5 = ssub.s32 1, %s3
  %s6 = scalar_select 0, %s5, %s3
  $region1: #{tpu_custom_call.1} parent=0
    #allocation3 [shape = 'u8[12288]{0}', space=vmem, size = 0x3000, scoped, tag = 'input window, operand 0, single buffered']
    #allocation4 [shape = 's32[1]{0}', space=sflag, size = 0x4, scoped, tag = 'scoped memory for tpu_custom_call.1']
    #allocation5 [shape = 's32[1]{0}', space=sflag, size = 0x4, scoped, tag = 'scoped memory for tpu_custom_call.1']
    #allocation6 [shape = 'u8[4096]{0}', space=vmem, size = 0x1000, scoped, tag = 'input window, operand 1, single buffered']
    #allocation7 [shape = 's32[1]{0}', space=sflag, size = 0x4, scoped, tag = 'scoped memory for tpu_custom_call.1']
    #allocation8 [shape = 'u8[512]{0}', space=vmem, size = 0x400, scoped, tag = 'output window, operand 0, single buffered']
    %7 = vsyncpa [#allocation4], 0
    %8 = vsyncpa [#allocation7], 0
    %9 = vsyncpa [#allocation5], 0
    // Predicated region
    $region2: #{tpu_custom_call.1} parent=1 // pred_check
      _
    $region3: #{tpu_custom_call.1} parent=1 // pred_check_branch
      %11 = sbr.rel (0) target = $region5
    $region4: #{tpu_custom_call.1} parent=1 // pred_region
      %s12 = sadd.s32 0, 0
      %s14 = ssub.s32 384, 384
      %15 = vsyncadd [#allocation4], %s14
      %s16 = smul.addr %s12, 128
      %s17 = scalar_lea.hbm %s0, %s16
      %s18 = sshll.u32 [#allocation3], 4
      %s19 = int_to_ptr.vmem [resolvable:$true] %s18
      %24 = dma.hbm_to_vmem [thread:$0]  %s17, 384, %s19, [#allocation4], 128, 128, 8
    $region5: #{tpu_custom_call.1} parent=1 // pred_fallthru
      _
    // Predicated region
    $region6: #{tpu_custom_call.1} parent=1 // pred_check
      _
    $region7: #{tpu_custom_call.1} parent=1 // pred_check_branch
      %26 = sbr.rel (0) target = $region9
    $region8: #{tpu_custom_call.1} parent=1 // pred_region
      %s27 = sadd.s32 0, 0
      %s29 = ssub.s32 128, 128
      %30 = vsyncadd [#allocation7], %s29
      %s31 = smul.addr %s27, 128
      %s32 = scalar_lea.hbm %s1, %s31
      %s34 = sshll.u32 [#allocation6], 4
      %s35 = int_to_ptr.vmem [resolvable:$true] %s34
      %37 = dma.hbm_to_vmem [thread:$0]  %s32, 128, %s35, [#allocation7]
    $region9: #{tpu_custom_call.1} parent=1 // pred_fallthru
      _
    // Predicated region
    $region10: #{tpu_custom_call.1} parent=1 // pred_check
      _
    $region11: #{tpu_custom_call.1} parent=1 // pred_check_branch
      %39 = sbr.rel (0) target = $region13
    $region12: #{tpu_custom_call.1} parent=1 // pred_region
      %40 = dma.done [#allocation4], 384
    $region13: #{tpu_custom_call.1} parent=1 // pred_fallthru
      _
    // Predicated region
    $region14: #{tpu_custom_call.1} parent=1 // pred_check
      _
    $region15: #{tpu_custom_call.1} parent=1 // pred_check_branch
      %42 = sbr.rel (0) target = $region17
    $region16: #{tpu_custom_call.1} parent=1 // pred_region
      %43 = dma.done [#allocation7], 128
    $region17: #{tpu_custom_call.1} parent=1 // pred_fallthru
      _
    %s44 = sadd.s32 0, 0
    %s45 = sadd.s32 0, 0
    %s46 = sadd.s32 0, 0
    %p47 = scmp.eq.s32.totalorder 0, 0
    // Predicated region
    $region18: #{tpu_custom_call.1} parent=1 // pred_check
      %p48 = pneg %p47
    $region19: #{tpu_custom_call.1} parent=1 // pred_check_branch
      %50 = sbr.rel (%p48) target = $region21
    $region20: #{tpu_custom_call.1} parent=1 // pred_region
      %51 = vst [vmem:[#allocation2] sm:$0xff] 0.0
    $region21: #{tpu_custom_call.1} parent=1 // pred_fallthru
      _
    %v52 = vld [vmem:[#allocation6] sm:$0xff]
    %v53 = vld [vmem:[#allocation3] sm:$0xff]
    %s54 = scalar_lea.vmem [#allocation3], 8
    %v55 = vld [vmem:[%s54] sm:$0xff]
    %s56 = scalar_lea.vmem [#allocation3], 16
    %v57 = vld [vmem:[%s56] sm:$0xff]
    %v58 = vmax.f32 %v53, %v55
    %v59 = vmax.f32 %v58, %v57
    %v60 = vsub.f32 %v53, %v59
    %v61 = vsub.f32 %v55, %v59
    %v62 = vsub.f32 %v57, %v59
    %v63 = vmul.f32 %v60, 1.442695
    %v64 = vpow.pop %v63
    %v65 = vmul.f32 %v61, 1.442695
    %v66 = vpow.pop %v65
    %v67 = vmul.f32 %v62, 1.442695
    %v68 = vpow.pop %v67
    %v69 = vadd.f32 %v64, %v66
    %v70 = vadd.f32 %v69, %v68
    %vm71 = vcmp.eq.s32.totalorder %v52, 1
    %v72 = vsel %vm71, %v61, %v62
    %vm73 = vcmp.eq.s32.totalorder %v52, 0
    %v74 = vsel %vm73, %v60, %v72
    %v75 = vsel %vm73, 0.25, 0.75
    %v76 = vlog2.pop %v70
    %v77 = vmul.f32 %v76, 0.6931472
    %v78 = vsub.f32 %v74, %v77
    %v79 = vmul.f32 %v78, 1.442695
    %v80 = vpow.pop %v79
    %v81 = vsub.f32 1.0, %v80
    %v82 = vmax.f32 %v81, 0.0
    %v83 = vmul.f32 %v82, %v82
    %v84 = vmul.f32 %v75, %v83
    %v85 = vmul.f32 %v84, %v78
    %v86 = vsub.f32 0.0, %v85
    %p87 = scmp.lt.s32.totalorder %s46, 0
    // Predicated region
    $region22: #{tpu_custom_call.1} parent=1 // pred_check
      %p88 = pneg %p87
    $region23: #{tpu_custom_call.1} parent=1 // pred_check_branch
      %90 = sbr.rel (%p88) target = $region25
    $region24: #{tpu_custom_call.1} parent=1 // pred_region
      %v91 = vld [vmem:[#allocation2] sm:$0xff]
      %v92 = vadd.f32 %v91, %v86
      %93 = vst [vmem:[#allocation2] sm:$0xff] %v92
    $region25: #{tpu_custom_call.1} parent=1 // pred_fallthru
      _
    %p94 = scmp.ge.s32.totalorder %s46, 0
    // Predicated region
    $region26: #{tpu_custom_call.1} parent=1 // pred_check
      %p95 = pneg %p94
    $region27: #{tpu_custom_call.1} parent=1 // pred_check_branch
      %97 = sbr.rel (%p95) target = $region29
    $region28: #{tpu_custom_call.1} parent=1 // pred_region
      %v98 = vlaneseq
      %v99 = vshrl.u32 %v98, 7
      %v100 = vlaneseq
      %v101 = vand.u32 %v100, 127
      %s102 = smul.u32 %s46, 8
      %v103 = vstv %s102
      %v104 = vadd.s32 %v103, %v99
      %v105 = vmul.u32 %v104, 128
      %v106 = vadd.s32 %v105, %v101
      %v107 = vld [vmem:[#allocation2] sm:$0xff]
      %vm108 = vcmp.lt.s32.totalorder %v106, 32
      %v109 = vsel %vm108, %v86, 0.0
      %v110 = vadd.f32 %v107, %v109
      %111 = vst [vmem:[#allocation2] sm:$0xff] %v110
    $region29: #{tpu_custom_call.1} parent=1 // pred_fallthru
      _
    // Predicated region
    $region30: #{tpu_custom_call.1} parent=1 // pred_check
      %p112 = pneg %p47
    $region31: #{tpu_custom_call.1} parent=1 // pred_check_branch
      %114 = sbr.rel (%p112) target = $region33
    $region32: #{tpu_custom_call.1} parent=1 // pred_region
      %v115 = vld [vmem:[#allocation2] sm:$0xff]
      %v116 = vrot.slane %v115, 4
      %v117 = vadd.f32 %v115, %v116
      %v118 = vrot.slane %v117, 2
      %v119 = vadd.f32 %v117, %v118
      %v120 = vrot.slane %v119, 1
      %v121 = vadd.f32 %v119, %v120
      %122 = vadd.xlane.f32.xlu0 %v121
      %v123 = vpop.xlane.xlu0 %122
      %vm124 = vcmask 0
      %125 = vst.msk [vmem:[#allocation8] sm:$0x1] %vm124, %v123
    $region33: #{tpu_custom_call.1} parent=1 // pred_fallthru
      _
    // Predicated region
    $region34: #{tpu_custom_call.1} parent=1 // pred_check
      _
    $region35: #{tpu_custom_call.1} parent=1 // pred_check_branch
      %127 = sbr.rel (0) target = $region37
    $region36: #{tpu_custom_call.1} parent=1 // pred_region
      %s129 = ssub.s32 16, 16
      %130 = vsyncadd [#allocation5], %s129
      %s132 = sshll.u32 [#allocation8], 4
      %s133 = int_to_ptr.vmem [resolvable:$true] %s132
      %135 = dma.vmem_to_hbm [thread:$0]  %s133, 16, %s2, [#allocation5]
    $region37: #{tpu_custom_call.1} parent=1 // pred_fallthru
      _
    // Predicated region
    $region38: #{tpu_custom_call.1} parent=1 // pred_check
      _
    $region39: #{tpu_custom_call.1} parent=1 // pred_check_branch
      %137 = sbr.rel (0) target = $region41
    $region40: #{tpu_custom_call.1} parent=1 // pred_region
      %138 = dma.done [#allocation5], 16
    $region41: #{tpu_custom_call.1} parent=1 // pred_fallthru
      _
    %139 = vsyncpa [#allocation4], 1
    %140 = vsyncpa [#allocation7], 1
    %141 = vsyncpa [#allocation5], 1

</llo_original>
